<compile_context>
chip_gen: v6e
topology: v6e:2x2x1
jax: 0.10.0
libtpu: 0.0.40
codegen_flags: <defaults>
</compile_context>

<pallas_src>
import functools

import jax
import jax.numpy as jnp
from jax.experimental import pallas as pl
from jax.experimental.pallas import tpu as pltpu

_LANE = 128
_SUBLANE = 8
_TARGET_BLOCK_BYTES = 4 * 1024 * 1024  # ~4 MiB per x block: per-step overhead << DMA time


def _round_up(x: int, m: int) -> int:
    return ((x + m - 1) // m) * m


def _build_pe_table(model_dimension: int, expected_max_sequence_length: int = 5000) -> jnp.ndarray:
    """Same construction as the PyTorch __init__ (sin on even cols, cos on odd cols)."""
    position_id = jnp.arange(0, expected_max_sequence_length, dtype=jnp.float32)[:, None]   # (L, 1)
    frequencies = jnp.power(
        10000.0, -jnp.arange(0, model_dimension, 2, dtype=jnp.float32) / model_dimension
    )                                                                                        # (D/2,)
    args = position_id * frequencies                                                         # (L, D/2)
    table = jnp.zeros((expected_max_sequence_length, model_dimension), dtype=jnp.float32)
    table = table.at[:, 0::2].set(jnp.sin(args))
    table = table.at[:, 1::2].set(jnp.cos(args))
    return table


def _pe_dropout_kernel(seed_ref, x_ref, pe_ref, o_ref, *,
                       dropout_p: float, total_cols: int, splits: int):
    # x_ref / o_ref: (TB, TC) lane-dense blocks of the flattened (B, S*D) input.
    # pe_ref:        (1, TC)  slice of the flattened PE row (sublane-broadcast over batch).
    y = x_ref[...].astype(pe_ref.dtype) + pe_ref[...]

    if dropout_p <= 0.0:                       # eval path: no RNG codegen at all
        o_ref[...] = y.astype(o_ref.dtype)
        return
    if dropout_p >= 1.0:                       # PyTorch: dropout(p=1) zeroes everything
        o_ref[...] = jnp.zeros(o_ref.shape, o_ref.dtype)
        return

    tb, tc = x_ref.shape
    cs = tc // splits                          # hash-chunk width (multiple of 128 when splits > 1)
    bits = 32 // splits
    thr = int(round(dropout_p * float(1 << bits)))
    thr = max(0, min(thr, (1 << bits) - 1))    # P(drop) = thr / 2^bits ~= dropout_p
    thr_u = jnp.uint32(thr)
    sub_mask = jnp.uint32((1 << bits) - 1)
    keep_scale = jnp.asarray(1.0 / (1.0 - dropout_p), dtype=y.dtype)
    zero = jnp.asarray(0.0, dtype=y.dtype)

    # Counter-based hash PRNG (lowbias32 mix).  One 32-bit hash supplies `splits`
    # decisions; every in-range element maps to a unique (counter, sub-word) pair.
    # NOTE: differs bit-for-bit from torch / jax.random dropout; statistics match.
    seed_mix = seed_ref[0].astype(jnp.uint32) * jnp.uint32(0x9E3779B9)
    r_base = (pl.program_id(1) * tb).astype(jnp.uint32)
    c_base = (pl.program_id(0) * tc).astype(jnp.uint32)
    # Row term hoisted to a narrow (TB, 1) uint32 column (saves full-width VALU ops).
    row_ids = jax.lax.broadcasted_iota(jnp.int32, (tb, 1), 0).astype(jnp.uint32) + r_base
    row_term = row_ids * jnp.uint32(total_cols) + c_base + seed_mix
    col_ids = jax.lax.broadcasted_iota(jnp.int32, (tb, cs), 1).astype(jnp.uint32)
    h = row_term + col_ids
    h = h ^ (h >> 16)
    h = h * jnp.uint32(0x7FEB352D)
    h = h ^ (h >> 15)
    h = h * jnp.uint32(0x846CA68B)
    h = h ^ (h >> 16)

    for q in range(splits):                    # static, fully unrolled
        if splits == 1:
            r = h
        elif q == 0:
            r = h & sub_mask
        elif q == splits - 1:
            r = h >> (32 - bits)
        else:
            r = (h >> (bits * q)) & sub_mask
        keep = r >= thr_u
        if splits == 1:
            o_ref[...] = jnp.where(keep, y * keep_scale, zero).astype(o_ref.dtype)
        else:
            y_q = y[:, q * cs:(q + 1) * cs]    # 128-aligned lane slice (no relayout)
            o_ref[:, q * cs:(q + 1) * cs] = jnp.where(
                keep, y_q * keep_scale, zero).astype(o_ref.dtype)


def positional_encoding_forward(
    embeddings_batch: jnp.ndarray,
    pe_table: jnp.ndarray,
    dropout_p: float,
    seed: int,
    training: bool = True,
    donate_input: bool = False,
) -> jnp.ndarray:
    """Pallas implementation of PositionalEncoding.forward.

    embeddings_batch: (B, S, D)
    pe_table:         (L, D) precomputed sinusoidal table (L >= S)
    """
    assert embeddings_batch.ndim == 3
    B, S, D = embeddings_batch.shape
    assert pe_table.shape[1] == D and pe_table.shape[0] >= S

    N = S * D
    # bf16 inputs stay bf16 through the elementwise chain (halves PE HBM read + VALU
    # width on v6e/v7x); everything else computes in f32.
    compute_dtype = embeddings_batch.dtype if embeddings_batch.dtype in (
        jnp.bfloat16, jnp.float32) else jnp.float32

    # Free, contiguous reshapes: lane-dense 2D view of x; PE as a single broadcast row.
    x2 = embeddings_batch.reshape(B, N)
    pe2 = pe_table[:S].reshape(1, N).astype(compute_dtype)

    itemsize = max(x2.dtype.itemsize, 1)
    target_elems = _TARGET_BLOCK_BYTES // itemsize

    # Row (batch) tile: multiples of 8 sublanes, capped; tiny batches use the full dim.
    # TODO(synk): for batch < 8 a (B*S, D)-row layout with a modulo PE index_map would
    # fill all sublanes, but it only pays off when D is a multiple of 128.
    if B >= _SUBLANE:
        TB = min((B // _SUBLANE) * _SUBLANE, 64)
    else:
        TB = B

    # Column tile: large multiple of 512 lanes, or the full flattened row when that
    # fits the block budget.  Ragged edges are handled by the pl.cdiv grid, never by
    # shrinking the tile to a small divisor.
    tc_budget = max(4 * _LANE, ((target_elems // TB) // (4 * _LANE)) * (4 * _LANE))
    TC = N if N <= tc_budget else tc_budget

    # v7x has 2 TensorCores: make sure at least one parallel axis has >= 2 steps.
    if pl.cdiv(B, TB) * pl.cdiv(N, TC) < 2 and N >= 2 * _LANE:
        TC = _round_up(pl.cdiv(N, 2), _LANE)

    # Batch (row) axis innermost => the PE column tile is DMA'd once per column tile
    # and reused across all batch rows.
    grid = (pl.cdiv(N, TC), pl.cdiv(B, TB))

    p = float(dropout_p) if training else 0.0
    if 0.0 < p < 1.0:
        splits = 4 if TC % (4 * _LANE) == 0 else (2 if TC % (2 * _LANE) == 0 else 1)
    else:
        splits = 1
    seed_arr = jnp.asarray([seed], dtype=jnp.int32)
    kernel = functools.partial(_pe_dropout_kernel, dropout_p=p, total_cols=N, splits=splits)

    # Double-buffered x/out/pe blocks plus headroom for elementwise temporaries.
    io_bytes = 2 * (2 * TB * TC * x2.dtype.itemsize + TC * pe2.dtype.itemsize)
    vmem_limit = int(min(56 * 2 ** 20, max(24 * 2 ** 20, io_bytes + 16 * 2 ** 20)))

    out2 = pl.pallas_call(
        kernel,
        out_shape=jax.ShapeDtypeStruct((B, N), embeddings_batch.dtype),
        grid_spec=pltpu.PrefetchScalarGridSpec(
            num_scalar_prefetch=1,                              # seed lives in SMEM
            grid=grid,
            in_specs=[
                pl.BlockSpec((TB, TC), lambda c, r, seed: (r, c)),
                pl.BlockSpec((1, TC), lambda c, r, seed: (0, c)),
            ],
            out_specs=pl.BlockSpec((TB, TC), lambda c, r, seed: (r, c)),
        ),
        compiler_params=pltpu.CompilerParams(
            dimension_semantics=("parallel", "parallel"),       # independent output blocks
            vmem_limit_bytes=vmem_limit,
        ),
        # Opt-in: alias x into the output when the caller no longer needs x
        # (removes the extra full-size allocation in the enclosing program).
        input_output_aliases={1: 0} if donate_input else {},
    )(seed_arr, x2, pe2)

    return out2.reshape(B, S, D)


if __name__ == "__main__":
    dropout_probability = 0.1
    key = jax.random.PRNGKey(0)

    def _check(B, S, D):
        x = jax.random.normal(jax.random.fold_in(key, S * D + B), (B, S, D), dtype=jnp.float32)
        pe_table = _build_pe_table(model_dimension=D, expected_max_sequence_length=5000)
        ref = x + pe_table[:S][None, :, :]

        # Eval-mode run (no dropout) must match the plain JAX reference exactly.
        out_eval = positional_encoding_forward(x, pe_table, dropout_probability, seed=0,
                                               training=False)
        out_eval = jax.block_until_ready(out_eval)
        assert out_eval.shape == (B, S, D)
        assert jnp.allclose(out_eval, ref, atol=1e-6), "eval-mode mismatch"

        # Training-mode values must be either dropped (0) or the reference / (1-p).
        out_tr = positional_encoding_forward(x, pe_table, dropout_probability, seed=0,
                                             training=True)
        out_tr = jax.block_until_ready(out_tr)
        keep_prob = 1.0 - dropout_probability
        is_zero = jnp.isclose(out_tr, 0.0, atol=1e-6)
        is_kept = jnp.isclose(out_tr, ref / keep_prob, rtol=1e-5, atol=1e-6)
        assert bool(jnp.all(is_zero | is_kept)), "training-mode dropout values mismatch"
        n_zero = int(jnp.sum(is_zero & ~is_kept))
        total = out_tr.size
        assert 0 < n_zero < total, "dropout produced a degenerate mask"
        rate = n_zero / total
        assert 0.02 < rate < 0.30, f"dropout rate {rate:.3f} far from p={dropout_probability}"

    # Small shape from the spec (B=2, S=8, D=32): exercises the full-threshold path.
    _check(2, 8, 32)
    # Larger shape: exercises the 4-decisions-per-hash (splits=4) training path.
    _check(4, 64, 64)

    print("KERNEL_OK")
</pallas_src>

<mosaic_0001>
module attributes {stable_mosaic.version = 11 : i64} {
  func.func @_pe_dropout_kernel(%arg0: i32, %arg1: i32, %arg2: memref<1xi32, #tpu.memory_space<smem>>, %arg3: memref<2x128xf32, #tpu.memory_space<vmem>>, %arg4: memref<1x128xf32, #tpu.memory_space<vmem>>, %arg5: memref<2x128xf32, #tpu.memory_space<vmem>>) attributes {dimension_semantics = [#tpu.dimension_semantics<parallel>, #tpu.dimension_semantics<parallel>], iteration_bounds = array<i64: 2, 1>, scalar_prefetch = 1 : i64, scratch_operands = 0 : i64, tpu.core_type = #tpu.core_type<tc>, window_params = [{transform_indices = @transform_0, window_bounds = array<i64: 2, 128>}, {transform_indices = @transform_1, window_bounds = array<i64: 1, 128>}, {transform_indices = @transform_2, window_bounds = array<i64: 2, 128>}]} {
    %c0 = arith.constant 0 : index
    %c0_0 = arith.constant 0 : index
    %0 = vector.load %arg3[%c0, %c0_0] : memref<2x128xf32, #tpu.memory_space<vmem>>, vector<2x128xf32>
    %c0_1 = arith.constant 0 : index
    %c0_2 = arith.constant 0 : index
    %1 = vector.load %arg4[%c0_1, %c0_2] : memref<1x128xf32, #tpu.memory_space<vmem>>, vector<1x128xf32>
    %2 = vector.broadcast %1 : vector<1x128xf32> to vector<2x128xf32>
    %3 = arith.addf %0, %2 : vector<2x128xf32>
    %c0_3 = arith.constant 0 : index
    %c0_4 = arith.constant 0 : index
    %4 = vector.load %arg5[%c0_3, %c0_4] : memref<2x128xf32, #tpu.memory_space<vmem>>, vector<2x128xf32>
    tpu.vector_store %arg5[%c0_3, %c0_4], %3 {strides = array<i32>} : memref<2x128xf32, #tpu.memory_space<vmem>>, vector<2x128xf32>,
    return
  }
  func.func @transform_0(%arg0: i32, %arg1: i32, %arg2: memref<1xi32, #tpu.memory_space<smem>>) -> (i32, i32) {
    %c0_i32 = arith.constant 0 : i32
    return %arg1, %arg0 : i32, i32
  }
  func.func @transform_1(%arg0: i32, %arg1: i32, %arg2: memref<1xi32, #tpu.memory_space<smem>>) -> (i32, i32) {
    %c0_i32 = arith.constant 0 : i32
    %c0_i32_0 = arith.constant 0 : i32
    return %c0_i32, %arg0 : i32, i32
  }
  func.func @transform_2(%arg0: i32, %arg1: i32, %arg2: memref<1xi32, #tpu.memory_space<smem>>) -> (i32, i32) {
    %c0_i32 = arith.constant 0 : i32
    return %arg1, %arg0 : i32, i32
  }
}

</mosaic_0001>

<llo_original>
// kernel: tpu_custom_call.1
$region0: #{tpu_custom_call.1}
  #allocation0 [shape = 'u32[]', space=smem, size = 0x4, offset = 0x4, fixed_abs, tag = 'smem constant byte address 0x4 - core index']
  #allocation1 [shape = 'u32[144,128]{1,0:T(1,128)}', space=vmem, size = 0x12000, scoped, tag = 'internal scratch']
  #allocation2 [shape = 's32[1]{0}', space=sflag, size = 0x4, scoped, tag = 'scoped memory for tpu_custom_call.1']
  #allocation3 [shape = 's32[1]{0:T(128)S(6)}', space=smem, size = 0x200, scoped, tag = 'prefetched SMEM operand 0']
  %s0 = inlined_call_operand.<no memory space> [shape: s32[1], index: 0, kind: input, shape index: {}]
  %s1 = inlined_call_operand.hbm [shape: f32[2,256], index: 1, kind: input, shape index: {}]
  %s2 = inlined_call_operand.vmem [shape: f32[1,256], index: 2, kind: input, shape index: {}]
  %s3 = inlined_call_operand.hbm [shape: f32[2,256], index: 3, kind: output, shape index: {}]
  %s4 = sld [smem:[#allocation0]]
  $region45: #{tpu_custom_call.1} parent=0
    _
  %s6 = ssub.s32 1, %s4
  %s7 = scalar_select 0, %s6, %s4
  %8 = sst [smem:[#allocation3]] %s0
  $region1: #{tpu_custom_call.1} parent=0
    #allocation4 [shape = 'u8[2048]{0}', space=vmem, size = 0x800, scoped, tag = 'input window, operand 1']
    #allocation5 [shape = 's32[2]{0}', space=sflag, size = 0x8, scoped, tag = 'scoped memory for tpu_custom_call.1']
    #allocation6 [shape = 's32[2]{0}', space=sflag, size = 0x8, scoped, tag = 'scoped memory for tpu_custom_call.1']
    #allocation7 [shape = 'u8[2048]{0}', space=vmem, size = 0x800, scoped, tag = 'output window, operand 0']
    %9 = vsyncpa [#allocation5], 0
    %s10 = scalar_lea.sflag [#allocation5], 1
    %11 = vsyncpa %s10, 0
    %12 = vsyncpa [#allocation6], 0
    %s13 = scalar_lea.sflag [#allocation6], 1
    %14 = vsyncpa %s13, 0
    loop: start=0, step=1, limit=4
    $region2: #{tpu_custom_call.1} parent=1 // loop_pre_header
      _
    $region3: #{tpu_custom_call.1} parent=1 // loop_header
      %s16 = sphi 0, %s20
      %p17 = scmp.ge.s32.totalorder %s16, 4
      %s23 = sphi 0, %s35
      %s24 = sphi 0, %s31
      %s25 = sphi 0, %s23
      %s26 = sphi 0, %s24
      %s27 = sphi 0, %s25
      %s28 = sphi 0, %s26
      %s40 = sphi 0, %s42
      %s43 = sphi 0, %s40
      %s44 = sphi 0, %s43
      %s60 = sphi 0, %s44
      %s66 = sphi 0, %s68
      %s69 = sphi 0, %s66
      %s70 = sphi 0, %s69
      %s86 = sphi 0, %s70
      %s94 = sphi 0, %s96
      %s97 = sphi 0, %s94
      %s98 = sphi 0, %s97
      %s114 = sphi 0, %s98
    $region4: #{tpu_custom_call.1} parent=1 // loop_header_branch
      %19 = sbr.rel (%p17) target = $region8
    $region5: #{tpu_custom_call.1} parent=1 // loop_body
      %s21 = ssub.s32 %s16, 1
      %s22 = ssub.s32 %s16, 2
      %s29 = sadd.s32 1, %s24
      %p30 = scmp.ge.s32.totalorder %s29, 1
      %s31 = scalar_select %p30, 0, %s29
      %s32 = sadd.s32 1, %s23
      %s33 = scalar_select %p30, %s32, %s23
      %p34 = scmp.ge.s32.totalorder %s33, 2
      %s35 = scalar_select %p34, 0, %s33
      %s36 = ssub.s32 %s24, %s31
      %s37 = ssub.s32 %s23, %s35
      %s38 = sor.u32 %s36, %s37
      %p39 = scmp.eq.s32.totalorder %s38, 0
      %s41 = sadd.s32 %s40, 1
      %s42 = scalar_select %p39, %s40, %s41
      %p45 = pneg %p39
      %p46 = scmp.eq.s32.totalorder %s16, 1
      %p47 = por %p45, %p46
      %p48 = scmp.ne.s32.totalorder %s40, %s43
      %p49 = scmp.eq.s32.totalorder %s16, 0
      %p50 = por %p48, %p49
      %p51 = scmp.ne.s32.totalorder %s40, %s43
      %p52 = scmp.eq.s32.totalorder %s21, 1
      %p53 = por %p51, %p52
      %p54 = scmp.ne.s32.totalorder %s43, %s44
      %p55 = scmp.eq.s32.totalorder %s21, 0
      %p56 = por %p54, %p55
      %p57 = scmp.ne.s32.totalorder %s43, %s44
      %p58 = scmp.eq.s32.totalorder %s22, 1
      %p59 = por %p57, %p58
      %p61 = scmp.ne.s32.totalorder %s44, %s60
      %p62 = scmp.eq.s32.totalorder %s22, 0
      %p63 = por %p61, %p62
      %s64 = ssub.s32 %s23, %s35
      %p65 = scmp.eq.s32.totalorder %s64, 0
      %s67 = sadd.s32 %s66, 1
      %s68 = scalar_select %p65, %s66, %s67
      %p71 = pneg %p65
      %p72 = scmp.eq.s32.totalorder %s16, 1
      %p73 = por %p71, %p72
      %p74 = scmp.ne.s32.totalorder %s66, %s69
      %p75 = scmp.eq.s32.totalorder %s16, 0
      %p76 = por %p74, %p75
      %p77 = scmp.ne.s32.totalorder %s66, %s69
      %p78 = scmp.eq.s32.totalorder %s21, 1
      %p79 = por %p77, %p78
      %p80 = scmp.ne.s32.totalorder %s69, %s70
      %p81 = scmp.eq.s32.totalorder %s21, 0
      %p82 = por %p80, %p81
      %p83 = scmp.ne.s32.totalorder %s69, %s70
      %p84 = scmp.eq.s32.totalorder %s22, 1
      %p85 = por %p83, %p84
      %p87 = scmp.ne.s32.totalorder %s70, %s86
      %p88 = scmp.eq.s32.totalorder %s22, 0
      %p89 = por %p87, %p88
      %s90 = ssub.s32 %s24, %s31
      %s91 = ssub.s32 %s23, %s35
      %s92 = sor.u32 %s90, %s91
      %p93 = scmp.eq.s32.totalorder %s92, 0
      %s95 = sadd.s32 %s94, 1
      %s96 = scalar_select %p93, %s94, %s95
      %p99 = pneg %p93
      %p100 = scmp.eq.s32.totalorder %s16, 1
      %p101 = por %p99, %p100
      %p102 = scmp.ne.s32.totalorder %s94, %s97
      %p103 = scmp.eq.s32.totalorder %s16, 0
      %p104 = por %p102, %p103
      %p105 = scmp.ne.s32.totalorder %s94, %s97
      %p106 = scmp.eq.s32.totalorder %s21, 1
      %p107 = por %p105, %p106
      %p108 = scmp.ne.s32.totalorder %s97, %s98
      %p109 = scmp.eq.s32.totalorder %s21, 0
      %p110 = por %p108, %p109
      %p111 = scmp.ne.s32.totalorder %s97, %s98
      %p112 = scmp.eq.s32.totalorder %s22, 1
      %p113 = por %p111, %p112
      %p115 = scmp.ne.s32.totalorder %s98, %s114
      %p116 = scmp.eq.s32.totalorder %s22, 0
      %p117 = por %p115, %p116
      %p118 = scmp.le.s32.totalorder 1, %s16
      %p119 = scmp.lt.s32.totalorder %s16, 3
      %p120 = pnand %p118, %p119
      %p121 = pneg %p120
      // Predicated region
      $region9: #{tpu_custom_call.1} parent=5 // pred_check
        _
      $region10: #{tpu_custom_call.1} parent=5 // pred_check_branch
        %123 = sbr.rel (%p120) target = $region12
      $region11: #{tpu_custom_call.1} parent=5 // pred_region
        %s124 = ssub.s32 %s16, 1
      $region12: #{tpu_custom_call.1} parent=5 // pred_fallthru
        _
      %p125 = scmp.lt.s32.totalorder %s16, 2
      // Predicated region
      $region13: #{tpu_custom_call.1} parent=5 // pred_check
        %p126 = pneg %p125
      $region14: #{tpu_custom_call.1} parent=5 // pred_check_branch
        %128 = sbr.rel (%p126) target = $region16
      $region15: #{tpu_custom_call.1} parent=5 // pred_region
        // Predicated region
        $region17: #{tpu_custom_call.1} parent=15 // pred_check
          %p129 = pneg %p50
        $region18: #{tpu_custom_call.1} parent=15 // pred_check_branch
          %131 = sbr.rel (%p129) target = $region20
        $region19: #{tpu_custom_call.1} parent=15 // pred_region
          %s132 = sand.u32 %s40, 1
          %s133 = scalar_lea.sflag [#allocation5], %s132
          %s134 = sand.u32 %s40, 1
          %s135 = smul.addr %s134, 2
          %s136 = scalar_lea.vmem [#allocation4], %s135
          %s138 = ssub.s32 32, 32
          %139 = vsyncadd %s133, %s138
          %s140 = smul.addr %s24, 2
          %s141 = sadd.s32 %s23, %s140
          %s142 = smul.addr %s141, 32
          %s143 = scalar_lea.hbm %s1, %s142
          %s145 = sshll.u32 %s136, 4
          %s146 = int_to_ptr.vmem [resolvable:$true] %s145
          %148 = dma.hbm_to_vmem [thread:$0]  %s143, 32, %s146, %s133
        $region20: #{tpu_custom_call.1} parent=15 // pred_fallthru
          _
        // Predicated region
        $region21: #{tpu_custom_call.1} parent=15 // pred_check
          %p149 = pneg %p76
        $region22: #{tpu_custom_call.1} parent=15 // pred_check_branch
          %151 = sbr.rel (%p149) target = $region24
        $region23: #{tpu_custom_call.1} parent=15 // pred_region
          %p152 = scmp.lt.s32.totalorder %s23, 1
          %s153 = scalar_select %p152, %s23, 1
          %s154 = scalar_lea.vmem %s2, %s153
        $region24: #{tpu_custom_call.1} parent=15 // pred_fallthru
          _
      $region16: #{tpu_custom_call.1} parent=5 // pred_fallthru
        _
      %p155 = scmp.le.s32.totalorder 1, %s16
      %p156 = scmp.lt.s32.totalorder %s16, 3
      %p157 = pnand %p155, %p156
      %p158 = pneg %p157
      // Predicated region
      $region25: #{tpu_custom_call.1} parent=5 // pred_check
        _
      $region26: #{tpu_custom_call.1} parent=5 // pred_check_branch
        %160 = sbr.rel (%p157) target = $region28
      $region27: #{tpu_custom_call.1} parent=5 // pred_region
        %s161 = ssub.s32 %s16, 1
        %s162 = sand.u32 %s43, 1
        %s163 = scalar_lea.sflag [#allocation5], %s162
        %s164 = sand.u32 %s43, 1
        %s165 = smul.addr %s164, 2
        %s166 = scalar_lea.vmem [#allocation4], %s165
        // Predicated region
        $region29: #{tpu_custom_call.1} parent=27 // pred_check
          %p167 = pneg %p56
        $region30: #{tpu_custom_call.1} parent=27 // pred_check_branch
          %169 = sbr.rel (%p167) target = $region32
        $region31: #{tpu_custom_call.1} parent=27 // pred_region
          %170 = dma.done %s163, 32
        $region32: #{tpu_custom_call.1} parent=27 // pred_fallthru
          _
        %s171 = sand.u32 %s43, 1
        %s172 = scalar_lea.sflag [#allocation5], %s171
        %s173 = sand.u32 %s43, 1
        %s174 = smul.addr %s173, 2
        %s175 = scalar_lea.vmem [#allocation4], %s174
        %p176 = pneg %p56
        %p177 = pneg %p53
        %p178 = scmp.lt.s32.totalorder %s25, 1
        %s179 = scalar_select %p178, %s25, 1
        %s180 = scalar_lea.vmem %s2, %s179
        %p181 = pneg %p82
        %p182 = pneg %p79
        %p183 = pneg %p110
        %p184 = pneg %p107
        %s185 = sand.u32 %s97, 1
        %s186 = scalar_lea.sflag [#allocation6], %s185
        %s187 = sand.u32 %s97, 1
        %s188 = smul.addr %s187, 2
        %s189 = scalar_lea.vmem [#allocation7], %s188
        %p190 = scmp.lt.s32.totalorder %s25, 1
        %s191 = scalar_select %p190, %s25, 1
        %s192 = scalar_lea.vmem %s2, %s191
        %v193 = vld [vmem:[%s166] sm:$0x3]
        %v194 = vld [vmem:[%s192] sm:$0x1]
        %v196 = vlaneseq
        %v197 = vshrl.u32 %v196, 7
        %v198 = vsub.s32 0, %v197
        %v199 = vrot.slane %v194, %v198
        %v201 = vadd.f32 %v193, %v199
        %202 = vst [vmem:[%s189] sm:$0x3] %v201
        %s203 = sand.u32 %s97, 1
        %s204 = scalar_lea.sflag [#allocation6], %s203
        %s205 = sand.u32 %s97, 1
        %s206 = smul.addr %s205, 2
        %s207 = scalar_lea.vmem [#allocation7], %s206
        // Predicated region
        $region33: #{tpu_custom_call.1} parent=27 // pred_check
          %p208 = pneg %p107
        $region34: #{tpu_custom_call.1} parent=27 // pred_check_branch
          %210 = sbr.rel (%p208) target = $region36
        $region35: #{tpu_custom_call.1} parent=27 // pred_region
          %s212 = ssub.s32 32, 32
          %213 = vsyncadd %s204, %s212
          %s214 = smul.addr %s26, 2
          %s215 = sadd.s32 %s25, %s214
          %s216 = smul.addr %s215, 32
          %s217 = scalar_lea.hbm %s3, %s216
          %s219 = sshll.u32 %s207, 4
          %s220 = int_to_ptr.vmem [resolvable:$true] %s219
          %222 = dma.vmem_to_hbm [thread:$0]  %s220, 32, %s217, %s204
        $region36: #{tpu_custom_call.1} parent=27 // pred_fallthru
          _
      $region28: #{tpu_custom_call.1} parent=5 // pred_fallthru
        _
      %p223 = scmp.le.s32.totalorder 2, %s16
      // Predicated region
      $region37: #{tpu_custom_call.1} parent=5 // pred_check
        %p224 = pneg %p223
      $region38: #{tpu_custom_call.1} parent=5 // pred_check_branch
        %226 = sbr.rel (%p224) target = $region40
      $region39: #{tpu_custom_call.1} parent=5 // pred_region
        %s227 = ssub.s32 %s16, 2
        // Predicated region
        $region41: #{tpu_custom_call.1} parent=39 // pred_check
          %p228 = pneg %p113
        $region42: #{tpu_custom_call.1} parent=39 // pred_check_branch
          %230 = sbr.rel (%p228) target = $region44
        $region43: #{tpu_custom_call.1} parent=39 // pred_region
          %s231 = sand.u32 %s98, 1
          %s232 = scalar_lea.sflag [#allocation6], %s231
          %s233 = sand.u32 %s98, 1
          %s234 = smul.addr %s233, 2
          %s235 = scalar_lea.vmem [#allocation7], %s234
          %236 = dma.done %s232, 32
        $region44: #{tpu_custom_call.1} parent=39 // pred_fallthru
          _
      $region40: #{tpu_custom_call.1} parent=5 // pred_fallthru
        _
    $region6: #{tpu_custom_call.1} parent=1 // loop_footer
      %s20 = sadd.s32 1, %s16
    $region7: #{tpu_custom_call.1} parent=1 // loop_footer_branch
      %15 = sbr.rel target = $region3
    $region8: #{tpu_custom_call.1} parent=1 // loop_exit
      _
    %237 = vsyncpa [#allocation5], 1
    %s238 = scalar_lea.sflag [#allocation5], 1
    %239 = vsyncpa %s238, 1
    %240 = vsyncpa [#allocation6], 1
    %s241 = scalar_lea.sflag [#allocation6], 1
    %242 = vsyncpa %s241, 1

</llo_original>
